<compile_context>
chip_gen: v7x
topology: tpu7x:2x2x1
jax: 0.10.0
libtpu: 0.0.40
codegen_flags: <defaults>
</compile_context>

<pallas_src>
import jax
import jax.numpy as jnp
from jax.experimental import pallas as pl
from jax.experimental.pallas import tpu as pltpu


def gru_cell_kernel(x_ref, h_ref, wx_ref, wh_ref, b_ref, bhn_ref, hy_ref):
    """Fused GRU cell for one batch tile: 2 matmuls + gating, all in VMEM."""
    H = hy_ref.shape[-1]
    h = h_ref[...]                                    # (Bt, H) f32, reused in blend

    # bf16 MXU matmuls, f32 accumulation; outputs are (Bt, 3H) lane-dense.
    # b_ref already holds [bx_r + bh_r, bx_i + bh_i, bx_n].
    gx = jnp.dot(x_ref[...].astype(wx_ref.dtype), wx_ref[...],
                 preferred_element_type=jnp.float32) + b_ref[...]
    gh = jnp.dot(h.astype(wh_ref.dtype), wh_ref[...],
                 preferred_element_type=jnp.float32)

    # H is a multiple of 128 here, so every slice below is lane-aligned.
    resetgate = jax.nn.sigmoid(gx[:, :H] + gh[:, :H])
    inputgate = jax.nn.sigmoid(gx[:, H:2 * H] + gh[:, H:2 * H])
    newgate = jnp.tanh(gx[:, 2 * H:] + resetgate * (gh[:, 2 * H:] + bhn_ref[...]))

    # hy = newgate + inputgate * (hidden - newgate)    (matches PyTorch GRUCell)
    hy = newgate + inputgate * (h - newgate)
    hy_ref[...] = hy.astype(hy_ref.dtype)


def pack_gru_params(x2h_w, x2h_b, h2h_w, h2h_b, *, weight_dtype=jnp.bfloat16):
    """One-time layout work: PyTorch (3H, In)/(3H, H) weights -> (K, 3H) layout."""
    H = h2h_w.shape[-1]
    wx = x2h_w.T.astype(weight_dtype)                           # (In, 3H)
    wh = h2h_w.T.astype(weight_dtype)                           # (H, 3H)
    # r/i biases can be pre-summed; the n-gate h-bias must stay separate
    # because the reset gate multiplies only the hidden n-contribution.
    b = jnp.concatenate([x2h_b[:2 * H] + h2h_b[:2 * H],
                         x2h_b[2 * H:]]).astype(jnp.float32).reshape(1, 3 * H)
    bh_n = h2h_b[2 * H:].astype(jnp.float32).reshape(1, H)
    return wx, wh, b, bh_n


def gru_cell(x, hidden, params, *, block_b=256, donate_hidden=False):
    """x: (B, In) f32, hidden: (B, H) f32, params from pack_gru_params.
    Returns hy: (B, H) in hidden.dtype.

    block_b : batch tile. 256 = MXU-native M on v6e/v7x (also a multiple of
              v5e's 128 rows). Batches <= block_b run as a single tile; larger
              ragged batches are zero-padded to whole tiles and sliced back.
    donate_hidden : alias `hidden` to the output (in-place RNN state update).
              Enable only when the caller does not reuse `hidden` afterwards.
    """
    wx, wh, b, bh_n = params
    B, In = x.shape
    H = hidden.shape[-1]
    H3 = 3 * H

    block_b = min(block_b, B)
    bp = block_b * pl.cdiv(B, block_b)          # pad batch to whole tiles
    if bp != B:
        x = jnp.pad(x, ((0, bp - B), (0, 0)))
        hidden_in = jnp.pad(hidden, ((0, bp - B), (0, 0)))
    else:
        hidden_in = hidden

    grid = (bp // block_b,)
    batched = lambda i: (i, 0)

    def run(single_buffer_weights):
        if single_buffer_weights:
            # Constant blocks never change -> single-buffering halves their VMEM.
            const = lambda shape: pl.BlockSpec(shape, lambda i: (0, 0),
                                               pipeline_mode=pl.Buffered(1))
        else:
            const = lambda shape: pl.BlockSpec(shape, lambda i: (0, 0))
        return pl.pallas_call(
            gru_cell_kernel,
            out_shape=jax.ShapeDtypeStruct((bp, H), hidden.dtype),
            grid=grid,
            in_specs=[
                pl.BlockSpec((block_b, In), batched),   # x  (f32, cast in-kernel)
                pl.BlockSpec((block_b, H), batched),    # h  (f32, reused for blend)
                const((In, H3)),                        # Wx (bf16, VMEM-resident)
                const((H, H3)),                         # Wh (bf16, VMEM-resident)
                const((1, H3)),                         # fused bias (r/i pre-summed)
                const((1, H)),                          # bh_n
            ],
            out_specs=pl.BlockSpec((block_b, H), batched),
            # Optional in-place RNN state update: hidden (input 1) -> hy (output 0).
            input_output_aliases={1: 0} if donate_hidden else {},
            compiler_params=pltpu.CompilerParams(
                dimension_semantics=("parallel",),       # batch tiles -> megacore
                vmem_limit_bytes=32 * 1024 * 1024),      # explicit budget (v7x-safe)
        )(x, hidden_in, wx, wh, b, bh_n)

    try:
        hy = run(single_buffer_weights=hasattr(pl, "Buffered"))
    except Exception:
        # Older JAX without BlockSpec pipeline_mode support: double-buffered specs.
        hy = run(single_buffer_weights=False)

    return hy if bp == B else hy[:B]


def gru_cell_ref(x, hidden, x2h_w, x2h_b, h2h_w, h2h_b):
    """Pure-JAX fp32 reference matching the PyTorch forward."""
    gate_x = x @ x2h_w.T + x2h_b
    gate_h = hidden @ h2h_w.T + h2h_b
    H = hidden.shape[-1]
    i_r, i_i, i_n = gate_x[:, :H], gate_x[:, H:2 * H], gate_x[:, 2 * H:]
    h_r, h_i, h_n = gate_h[:, :H], gate_h[:, H:2 * H], gate_h[:, 2 * H:]
    resetgate = jax.nn.sigmoid(i_r + h_r)
    inputgate = jax.nn.sigmoid(i_i + h_i)
    newgate = jnp.tanh(i_n + resetgate * h_n)
    return newgate + inputgate * (hidden - newgate)


if __name__ == "__main__":
    batch = 16            # <= block_b -> single tile, grid=(1,)
    input_size = 64
    hidden_size = 128

    key = jax.random.PRNGKey(0)
    kx, kh, kwx, kwh, kbx, kbh = jax.random.split(key, 6)

    # Deterministic init mirroring reset_parameters(): uniform(-std, std),
    # std = 1/sqrt(hidden_size).  Weights kept in PyTorch (out, in) layout.
    std = 1.0 / (hidden_size ** 0.5)
    x2h_w = jax.random.uniform(kwx, (3 * hidden_size, input_size),
                               jnp.float32, -std, std)
    h2h_w = jax.random.uniform(kwh, (3 * hidden_size, hidden_size),
                               jnp.float32, -std, std)
    x2h_b = jax.random.uniform(kbx, (3 * hidden_size,), jnp.float32, -std, std)
    h2h_b = jax.random.uniform(kbh, (3 * hidden_size,), jnp.float32, -std, std)

    x = jax.random.normal(kx, (batch, input_size), jnp.float32)
    hidden = jax.random.normal(kh, (batch, hidden_size), jnp.float32)

    # fp32 module reference — computed BEFORE the kernel call since `hidden`
    # is donated (aliased into the kernel output) below.
    hy_ref = jax.block_until_ready(
        gru_cell_ref(x, hidden, x2h_w, x2h_b, h2h_w, h2h_b))

    params = pack_gru_params(x2h_w, x2h_b, h2h_w, h2h_b)
    # donate_hidden=True is safe here: hy_ref is already materialized and
    # `hidden` is not used again after this call.
    hy = gru_cell(x, hidden, params, donate_hidden=True)
    hy = jax.block_until_ready(hy)

    assert hy.shape == (batch, hidden_size)
    # Weights/matmul inputs are intentionally bf16 on the MXU (f32 accumulation);
    # tolerance is sized for bf16 rounding, not bit parity with fp32 PyTorch.
    # (For bit-level fp32 parity: keep f32 weights + precision=HIGHEST dots.)
    assert jnp.allclose(hy, hy_ref, atol=5e-2, rtol=5e-2), "mismatch vs reference"

    print("KERNEL_OK")
</pallas_src>

<mosaic_0001>
module attributes {stable_mosaic.version = 11 : i64} {
  func.func @gru_cell_kernel(%arg0: i32, %arg1: memref<16x64xf32, #tpu.memory_space<vmem>>, %arg2: memref<16x128xf32, #tpu.memory_space<vmem>>, %arg3: memref<64x384xbf16, #tpu.memory_space<vmem>>, %arg4: memref<128x384xbf16, #tpu.memory_space<vmem>>, %arg5: memref<1x384xf32, #tpu.memory_space<vmem>>, %arg6: memref<1x128xf32, #tpu.memory_space<vmem>>, %arg7: memref<16x128xf32, #tpu.memory_space<vmem>>) attributes {dimension_semantics = [#tpu.dimension_semantics<parallel>], iteration_bounds = array<i64: 1>, scalar_prefetch = 0 : i64, scratch_operands = 0 : i64, tpu.core_type = #tpu.core_type<tc>, window_params = [{transform_indices = @transform_0, window_bounds = array<i64: 16, 64>}, {transform_indices = @transform_1, window_bounds = array<i64: 16, 128>}, {pipeline_mode = #tpu.pipeline_mode<synchronous>, transform_indices = @transform_2, window_bounds = array<i64: 64, 384>}, {pipeline_mode = #tpu.pipeline_mode<synchronous>, transform_indices = @transform_3, window_bounds = array<i64: 128, 384>}, {pipeline_mode = #tpu.pipeline_mode<synchronous>, transform_indices = @transform_4, window_bounds = array<i64: 1, 384>}, {pipeline_mode = #tpu.pipeline_mode<synchronous>, transform_indices = @transform_5, window_bounds = array<i64: 1, 128>}, {transform_indices = @transform_6, window_bounds = array<i64: 16, 128>}]} {
    %c0 = arith.constant 0 : index
    %c0_0 = arith.constant 0 : index
    %0 = vector.load %arg2[%c0, %c0_0] : memref<16x128xf32, #tpu.memory_space<vmem>>, vector<16x128xf32>
    %c0_1 = arith.constant 0 : index
    %c0_2 = arith.constant 0 : index
    %1 = vector.load %arg1[%c0_1, %c0_2] : memref<16x64xf32, #tpu.memory_space<vmem>>, vector<16x64xf32>
    %2 = arith.truncf %1 : vector<16x64xf32> to vector<16x64xbf16>
    %c0_3 = arith.constant 0 : index
    %c0_4 = arith.constant 0 : index
    %3 = vector.load %arg3[%c0_3, %c0_4] : memref<64x384xbf16, #tpu.memory_space<vmem>>, vector<64x384xbf16>
    %cst = arith.constant dense<0.000000e+00> : vector<16x384xf32>
    %4 = tpu.matmul %2, %3, %cst {dimension_numbers = #tpu.dot_dimension_numbers<[1], [0], [0], [1], [0, 0, 1, 1], [], []>} : vector<16x64xbf16>, vector<64x384xbf16>, vector<16x384xf32> -> vector<16x384xf32>
    %c0_5 = arith.constant 0 : index
    %c0_6 = arith.constant 0 : index
    %5 = vector.load %arg5[%c0_5, %c0_6] : memref<1x384xf32, #tpu.memory_space<vmem>>, vector<1x384xf32>
    %6 = vector.broadcast %5 : vector<1x384xf32> to vector<16x384xf32>
    %7 = arith.addf %4, %6 : vector<16x384xf32>
    %8 = arith.truncf %0 : vector<16x128xf32> to vector<16x128xbf16>
    %c0_7 = arith.constant 0 : index
    %c0_8 = arith.constant 0 : index
    %9 = vector.load %arg4[%c0_7, %c0_8] : memref<128x384xbf16, #tpu.memory_space<vmem>>, vector<128x384xbf16>
    %cst_9 = arith.constant dense<0.000000e+00> : vector<16x384xf32>
    %10 = tpu.matmul %8, %9, %cst_9 {dimension_numbers = #tpu.dot_dimension_numbers<[1], [0], [0], [1], [0, 0, 1, 1], [], []>} : vector<16x128xbf16>, vector<128x384xbf16>, vector<16x384xf32> -> vector<16x384xf32>
    %11 = vector.extract_strided_slice %7 {offsets = [0, 0], sizes = [16, 128], strides = [1, 1]} : vector<16x384xf32> to vector<16x128xf32>
    %12 = vector.extract_strided_slice %10 {offsets = [0, 0], sizes = [16, 128], strides = [1, 1]} : vector<16x384xf32> to vector<16x128xf32>
    %13 = arith.addf %11, %12 : vector<16x128xf32>
    %14 = arith.negf %13 : vector<16x128xf32>
    %15 = math.exp %14 : vector<16x128xf32>
    %cst_10 = arith.constant 1.000000e+00 : f32
    %16 = vector.broadcast %cst_10 : f32 to vector<16x128xf32>
    %17 = arith.addf %16, %15 : vector<16x128xf32>
    %18 = arith.divf %16, %17 : vector<16x128xf32>
    %19 = vector.extract_strided_slice %7 {offsets = [0, 128], sizes = [16, 128], strides = [1, 1]} : vector<16x384xf32> to vector<16x128xf32>
    %20 = vector.extract_strided_slice %10 {offsets = [0, 128], sizes = [16, 128], strides = [1, 1]} : vector<16x384xf32> to vector<16x128xf32>
    %21 = arith.addf %19, %20 : vector<16x128xf32>
    %22 = arith.negf %21 : vector<16x128xf32>
    %23 = math.exp %22 : vector<16x128xf32>
    %cst_11 = arith.constant 1.000000e+00 : f32
    %24 = vector.broadcast %cst_11 : f32 to vector<16x128xf32>
    %25 = arith.addf %24, %23 : vector<16x128xf32>
    %26 = arith.divf %24, %25 : vector<16x128xf32>
    %27 = vector.extract_strided_slice %7 {offsets = [0, 256], sizes = [16, 128], strides = [1, 1]} : vector<16x384xf32> to vector<16x128xf32>
    %28 = vector.extract_strided_slice %10 {offsets = [0, 256], sizes = [16, 128], strides = [1, 1]} : vector<16x384xf32> to vector<16x128xf32>
    %c0_12 = arith.constant 0 : index
    %c0_13 = arith.constant 0 : index
    %29 = vector.load %arg6[%c0_12, %c0_13] : memref<1x128xf32, #tpu.memory_space<vmem>>, vector<1x128xf32>
    %30 = vector.broadcast %29 : vector<1x128xf32> to vector<16x128xf32>
    %31 = arith.addf %28, %30 : vector<16x128xf32>
    %32 = arith.mulf %18, %31 : vector<16x128xf32>
    %33 = arith.addf %27, %32 : vector<16x128xf32>
    %34 = math.tanh %33 : vector<16x128xf32>
    %35 = arith.subf %0, %34 : vector<16x128xf32>
    %36 = arith.mulf %26, %35 : vector<16x128xf32>
    %37 = arith.addf %34, %36 : vector<16x128xf32>
    %c0_14 = arith.constant 0 : index
    %c0_15 = arith.constant 0 : index
    %38 = vector.load %arg7[%c0_14, %c0_15] : memref<16x128xf32, #tpu.memory_space<vmem>>, vector<16x128xf32>
    tpu.vector_store %arg7[%c0_14, %c0_15], %37 {strides = array<i32>} : memref<16x128xf32, #tpu.memory_space<vmem>>, vector<16x128xf32>,
    return
  }
  func.func @transform_0(%arg0: i32) -> (i32, i32) {
    %c0_i32 = arith.constant 0 : i32
    %c0_i32_0 = arith.constant 0 : i32
    return %arg0, %c0_i32 : i32, i32
  }
  func.func @transform_1(%arg0: i32) -> (i32, i32) {
    %c0_i32 = arith.constant 0 : i32
    %c0_i32_0 = arith.constant 0 : i32
    return %arg0, %c0_i32 : i32, i32
  }
  func.func @transform_2(%arg0: i32) -> (i32, i32) {
    %c0_i32 = arith.constant 0 : i32
    %c0_i32_0 = arith.constant 0 : i32
    %c0_i32_1 = arith.constant 0 : i32
    return %c0_i32, %c0_i32_0 : i32, i32
  }
  func.func @transform_3(%arg0: i32) -> (i32, i32) {
    %c0_i32 = arith.constant 0 : i32
    %c0_i32_0 = arith.constant 0 : i32
    %c0_i32_1 = arith.constant 0 : i32
    return %c0_i32, %c0_i32_0 : i32, i32
  }
  func.func @transform_4(%arg0: i32) -> (i32, i32) {
    %c0_i32 = arith.constant 0 : i32
    %c0_i32_0 = arith.constant 0 : i32
    %c0_i32_1 = arith.constant 0 : i32
    return %c0_i32, %c0_i32_0 : i32, i32
  }
  func.func @transform_5(%arg0: i32) -> (i32, i32) {
    %c0_i32 = arith.constant 0 : i32
    %c0_i32_0 = arith.constant 0 : i32
    %c0_i32_1 = arith.constant 0 : i32
    return %c0_i32, %c0_i32_0 : i32, i32
  }
  func.func @transform_6(%arg0: i32) -> (i32, i32) {
    %c0_i32 = arith.constant 0 : i32
    %c0_i32_0 = arith.constant 0 : i32
    return %arg0, %c0_i32 : i32, i32
  }
}

module attributes {stable_mosaic.version = 11 : i64} {
  func.func @gru_cell_kernel(%arg0: i32, %arg1: memref<16x64xf32, #tpu.memory_space<vmem>>, %arg2: memref<16x128xf32, #tpu.memory_space<vmem>>, %arg3: memref<64x384xbf16, #tpu.memory_space<vmem>>, %arg4: memref<128x384xbf16, #tpu.memory_space<vmem>>, %arg5: memref<1x384xf32, #tpu.memory_space<vmem>>, %arg6: memref<1x128xf32, #tpu.memory_space<vmem>>, %arg7: memref<16x128xf32, #tpu.memory_space<vmem>>) attributes {dimension_semantics = [#tpu.dimension_semantics<parallel>], iteration_bounds = array<i64: 1>, scalar_prefetch = 0 : i64, scratch_operands = 0 : i64, tpu.core_type = #tpu.core_type<tc>, window_params = [{transform_indices = @transform_0, window_bounds = array<i64: 16, 64>}, {transform_indices = @transform_1, window_bounds = array<i64: 16, 128>}, {pipeline_mode = #tpu.pipeline_mode<synchronous>, transform_indices = @transform_2, window_bounds = array<i64: 64, 384>}, {pipeline_mode = #tpu.pipeline_mode<synchronous>, transform_indices = @transform_3, window_bounds = array<i64: 128, 384>}, {pipeline_mode = #tpu.pipeline_mode<synchronous>, transform_indices = @transform_4, window_bounds = array<i64: 1, 384>}, {pipeline_mode = #tpu.pipeline_mode<synchronous>, transform_indices = @transform_5, window_bounds = array<i64: 1, 128>}, {transform_indices = @transform_6, window_bounds = array<i64: 16, 128>}]} {
    %c0 = arith.constant 0 : index
    %c0_0 = arith.constant 0 : index
    %0 = vector.load %arg2[%c0, %c0_0] : memref<16x128xf32, #tpu.memory_space<vmem>>, vector<16x128xf32>
    %c0_1 = arith.constant 0 : index
    %c0_2 = arith.constant 0 : index
    %1 = vector.load %arg1[%c0_1, %c0_2] : memref<16x64xf32, #tpu.memory_space<vmem>>, vector<16x64xf32>
    %2 = arith.truncf %1 : vector<16x64xf32> to vector<16x64xbf16>
    %c0_3 = arith.constant 0 : index
    %c0_4 = arith.constant 0 : index
    %3 = vector.load %arg3[%c0_3, %c0_4] : memref<64x384xbf16, #tpu.memory_space<vmem>>, vector<64x384xbf16>
    %cst = arith.constant dense<0.000000e+00> : vector<16x384xf32>
    %4 = tpu.matmul %2, %3, %cst {dimension_numbers = #tpu.dot_dimension_numbers<[1], [0], [0], [1], [0, 0, 1, 1], [], []>} : vector<16x64xbf16>, vector<64x384xbf16>, vector<16x384xf32> -> vector<16x384xf32>
    %c0_5 = arith.constant 0 : index
    %c0_6 = arith.constant 0 : index
    %5 = vector.load %arg5[%c0_5, %c0_6] : memref<1x384xf32, #tpu.memory_space<vmem>>, vector<1x384xf32>
    %6 = vector.broadcast %5 : vector<1x384xf32> to vector<16x384xf32>
    %7 = arith.addf %4, %6 : vector<16x384xf32>
    %8 = arith.truncf %0 : vector<16x128xf32> to vector<16x128xbf16>
    %c0_7 = arith.constant 0 : index
    %c0_8 = arith.constant 0 : index
    %9 = vector.load %arg4[%c0_7, %c0_8] : memref<128x384xbf16, #tpu.memory_space<vmem>>, vector<128x384xbf16>
    %cst_9 = arith.constant dense<0.000000e+00> : vector<16x384xf32>
    %10 = tpu.matmul %8, %9, %cst_9 {dimension_numbers = #tpu.dot_dimension_numbers<[1], [0], [0], [1], [0, 0, 1, 1], [], []>} : vector<16x128xbf16>, vector<128x384xbf16>, vector<16x384xf32> -> vector<16x384xf32>
    %11 = vector.extract_strided_slice %7 {offsets = [0, 0], sizes = [16, 128], strides = [1, 1]} : vector<16x384xf32> to vector<16x128xf32>
    %12 = vector.extract_strided_slice %10 {offsets = [0, 0], sizes = [16, 128], strides = [1, 1]} : vector<16x384xf32> to vector<16x128xf32>
    %13 = arith.addf %11, %12 : vector<16x128xf32>
    %14 = arith.negf %13 : vector<16x128xf32>
    %15 = math.exp %14 : vector<16x128xf32>
    %cst_10 = arith.constant 1.000000e+00 : f32
    %16 = vector.broadcast %cst_10 : f32 to vector<16x128xf32>
    %17 = arith.addf %16, %15 : vector<16x128xf32>
    %18 = arith.divf %16, %17 : vector<16x128xf32>
    %19 = vector.extract_strided_slice %7 {offsets = [0, 128], sizes = [16, 128], strides = [1, 1]} : vector<16x384xf32> to vector<16x128xf32>
    %20 = vector.extract_strided_slice %10 {offsets = [0, 128], sizes = [16, 128], strides = [1, 1]} : vector<16x384xf32> to vector<16x128xf32>
    %21 = arith.addf %19, %20 : vector<16x128xf32>
    %22 = arith.negf %21 : vector<16x128xf32>
    %23 = math.exp %22 : vector<16x128xf32>
    %cst_11 = arith.constant 1.000000e+00 : f32
    %24 = vector.broadcast %cst_11 : f32 to vector<16x128xf32>
    %25 = arith.addf %24, %23 : vector<16x128xf32>
    %26 = arith.divf %24, %25 : vector<16x128xf32>
    %27 = vector.extract_strided_slice %7 {offsets = [0, 256], sizes = [16, 128], strides = [1, 1]} : vector<16x384xf32> to vector<16x128xf32>
    %28 = vector.extract_strided_slice %10 {offsets = [0, 256], sizes = [16, 128], strides = [1, 1]} : vector<16x384xf32> to vector<16x128xf32>
    %c0_12 = arith.constant 0 : index
    %c0_13 = arith.constant 0 : index
    %29 = vector.load %arg6[%c0_12, %c0_13] : memref<1x128xf32, #tpu.memory_space<vmem>>, vector<1x128xf32>
    %30 = vector.broadcast %29 : vector<1x128xf32> to vector<16x128xf32>
    %31 = arith.addf %28, %30 : vector<16x128xf32>
    %32 = arith.mulf %18, %31 : vector<16x128xf32>
    %33 = arith.addf %27, %32 : vector<16x128xf32>
    %34 = math.tanh %33 : vector<16x128xf32>
    %35 = arith.subf %0, %34 : vector<16x128xf32>
    %36 = arith.mulf %26, %35 : vector<16x128xf32>
    %37 = arith.addf %34, %36 : vector<16x128xf32>
    %c0_14 = arith.constant 0 : index
    %c0_15 = arith.constant 0 : index
    %38 = vector.load %arg7[%c0_14, %c0_15] : memref<16x128xf32, #tpu.memory_space<vmem>>, vector<16x128xf32>
    tpu.vector_store %arg7[%c0_14, %c0_15], %37 {strides = array<i32>} : memref<16x128xf32, #tpu.memory_space<vmem>>, vector<16x128xf32>,
    return
  }
  func.func @transform_0(%arg0: i32) -> (i32, i32) {
    %c0_i32 = arith.constant 0 : i32
    %c0_i32_0 = arith.constant 0 : i32
    return %arg0, %c0_i32 : i32, i32
  }
  func.func @transform_1(%arg0: i32) -> (i32, i32) {
    %c0_i32 = arith.constant 0 : i32
    %c0_i32_0 = arith.constant 0 : i32
    return %arg0, %c0_i32 : i32, i32
  }
  func.func @transform_2(%arg0: i32) -> (i32, i32) {
    %c0_i32 = arith.constant 0 : i32
    %c0_i32_0 = arith.constant 0 : i32
    %c0_i32_1 = arith.constant 0 : i32
    return %c0_i32, %c0_i32_0 : i32, i32
  }
  func.func @transform_3(%arg0: i32) -> (i32, i32) {
    %c0_i32 = arith.constant 0 : i32
    %c0_i32_0 = arith.constant 0 : i32
    %c0_i32_1 = arith.constant 0 : i32
    return %c0_i32, %c0_i32_0 : i32, i32
  }
  func.func @transform_4(%arg0: i32) -> (i32, i32) {
    %c0_i32 = arith.constant 0 : i32
    %c0_i32_0 = arith.constant 0 : i32
    %c0_i32_1 = arith.constant 0 : i32
    return %c0_i32, %c0_i32_0 : i32, i32
  }
  func.func @transform_5(%arg0: i32) -> (i32, i32) {
    %c0_i32 = arith.constant 0 : i32
    %c0_i32_0 = arith.constant 0 : i32
    %c0_i32_1 = arith.constant 0 : i32
    return %c0_i32, %c0_i32_0 : i32, i32
  }
  func.func @transform_6(%arg0: i32) -> (i32, i32) {
    %c0_i32 = arith.constant 0 : i32
    %c0_i32_0 = arith.constant 0 : i32
    return %arg0, %c0_i32 : i32, i32
  }
}

</mosaic_0001>

<llo_original>
// kernel: tpu_custom_call.1
$region0: #{tpu_custom_call.1}
  #allocation0 [shape = 'u32[]', space=smem, size = 0x4, offset = 0x4, fixed_abs, tag = 'smem constant byte address 0x4 - core index']
  #allocation1 [shape = 'u32[144,128]{1,0:T(1,128)}', space=vmem, size = 0x12000, scoped, tag = 'internal scratch']
  %s0 = inlined_call_operand.vmem [shape: f32[16,64], index: 0, kind: input, shape index: {}]
  %s1 = inlined_call_operand.hbm [shape: f32[16,128], index: 1, kind: input, shape index: {}, may-alias: {1,6}]
  %s2 = inlined_call_operand.hbm [shape: bf16[64,384], index: 2, kind: input, shape index: {}]
  %s3 = inlined_call_operand.hbm [shape: bf16[128,384], index: 3, kind: input, shape index: {}]
  %s4 = inlined_call_operand.vmem [shape: f32[1,384], index: 4, kind: input, shape index: {}]
  %s5 = inlined_call_operand.vmem [shape: f32[1,128], index: 5, kind: input, shape index: {}]
  %s6 = inlined_call_operand.hbm [shape: f32[16,128], index: 6, kind: output, shape index: {}, may-alias: {1,6}]
  %s7 = sld [smem:[#allocation0]]
  $region46: #{tpu_custom_call.1} parent=0
    _
  %s9 = ssub.s32 1, %s7
  %s10 = scalar_select 0, %s9, %s7
  $region1: #{tpu_custom_call.1} parent=0
    #allocation2 [shape = 'u8[8192]{0}', space=vmem, size = 0x2000, scoped, tag = 'input window, operand 1, single buffered']
    #allocation3 [shape = 's32[1]{0}', space=sflag, size = 0x4, scoped, tag = 'scoped memory for tpu_custom_call.1']
    #allocation4 [shape = 's32[1]{0}', space=sflag, size = 0x4, scoped, tag = 'scoped memory for tpu_custom_call.1']
    #allocation5 [shape = 'u8[49152]{0}', space=vmem, size = 0xc000, scoped, tag = 'input window, operand 2, single buffered']
    #allocation6 [shape = 's32[1]{0}', space=sflag, size = 0x4, scoped, tag = 'scoped memory for tpu_custom_call.1']
    #allocation7 [shape = 'u8[98304]{0}', space=vmem, size = 0x18000, scoped, tag = 'input window, operand 3, single buffered']
    #allocation8 [shape = 'u8[8192]{0}', space=vmem, size = 0x2000, scoped, tag = 'output window, operand 0, single buffered']
    %11 = vsyncpa [#allocation3], 0
    %12 = vsyncpa [#allocation6], 0
    %13 = vsyncpa [#allocation4], 0
    // Predicated region
    $region2: #{tpu_custom_call.1} parent=1 // pred_check
      _
    $region3: #{tpu_custom_call.1} parent=1 // pred_check_branch
      %15 = sbr.rel (0) target = $region5
    $region4: #{tpu_custom_call.1} parent=1 // pred_region
      _
    $region5: #{tpu_custom_call.1} parent=1 // pred_fallthru
      _
    // Predicated region
    $region6: #{tpu_custom_call.1} parent=1 // pred_check
      _
    $region7: #{tpu_custom_call.1} parent=1 // pred_check_branch
      %17 = sbr.rel (0) target = $region9
    $region8: #{tpu_custom_call.1} parent=1 // pred_region
      %s19 = ssub.s32 256, 256
      %20 = vsyncadd [#allocation3], %s19
      %s21 = sshll.u32 [#allocation2], 4
      %s22 = int_to_ptr.vmem [resolvable:$true] %s21
      %27 = dma.hbm_to_vmem [thread:$0]  %s1, 256, %s22, [#allocation3], 128, 128, 8
    $region9: #{tpu_custom_call.1} parent=1 // pred_fallthru
      _
    // Predicated region
    $region10: #{tpu_custom_call.1} parent=1 // pred_check
      _
    $region11: #{tpu_custom_call.1} parent=1 // pred_check_branch
      %29 = sbr.rel (0) target = $region13
    $region12: #{tpu_custom_call.1} parent=1 // pred_region
      %s31 = ssub.s32 1536, 1536
      %32 = vsyncadd [#allocation6], %s31
      %s33 = sshll.u32 [#allocation5], 4
      %s34 = int_to_ptr.vmem [resolvable:$true] %s33
      %39 = dma.hbm_to_vmem [thread:$0]  %s2, 1536, %s34, [#allocation6], 192, 192, 12
    $region13: #{tpu_custom_call.1} parent=1 // pred_fallthru
      _
    // Predicated region
    $region14: #{tpu_custom_call.1} parent=1 // pred_check
      _
    $region15: #{tpu_custom_call.1} parent=1 // pred_check_branch
      %41 = sbr.rel (0) target = $region17
    $region16: #{tpu_custom_call.1} parent=1 // pred_region
      %s43 = ssub.s32 3072, 3072
      %44 = vsyncadd [#allocation6], %s43
      %s45 = sshll.u32 [#allocation7], 4
      %s46 = int_to_ptr.vmem [resolvable:$true] %s45
      %51 = dma.hbm_to_vmem [thread:$0]  %s3, 3072, %s46, [#allocation6], 192, 192, 12
    $region17: #{tpu_custom_call.1} parent=1 // pred_fallthru
      _
    // Predicated region
    $region18: #{tpu_custom_call.1} parent=1 // pred_check
      _
    $region19: #{tpu_custom_call.1} parent=1 // pred_check_branch
      %53 = sbr.rel (0) target = $region21
    $region20: #{tpu_custom_call.1} parent=1 // pred_region
      _
    $region21: #{tpu_custom_call.1} parent=1 // pred_fallthru
      _
    // Predicated region
    $region22: #{tpu_custom_call.1} parent=1 // pred_check
      _
    $region23: #{tpu_custom_call.1} parent=1 // pred_check_branch
      %55 = sbr.rel (0) target = $region25
    $region24: #{tpu_custom_call.1} parent=1 // pred_region
      _
    $region25: #{tpu_custom_call.1} parent=1 // pred_fallthru
      _
    // Predicated region
    $region26: #{tpu_custom_call.1} parent=1 // pred_check
      _
    $region27: #{tpu_custom_call.1} parent=1 // pred_check_branch
      %57 = sbr.rel (0) target = $region29
    $region28: #{tpu_custom_call.1} parent=1 // pred_region
      %58 = dma.done [#allocation3], 256
    $region29: #{tpu_custom_call.1} parent=1 // pred_fallthru
      _
    // Predicated region
    $region30: #{tpu_custom_call.1} parent=1 // pred_check
      _
    $region31: #{tpu_custom_call.1} parent=1 // pred_check_branch
      %60 = sbr.rel (0) target = $region33
    $region32: #{tpu_custom_call.1} parent=1 // pred_region
      %61 = dma.done [#allocation6], 1536
    $region33: #{tpu_custom_call.1} parent=1 // pred_fallthru
      _
    // Predicated region
    $region34: #{tpu_custom_call.1} parent=1 // pred_check
      _
    $region35: #{tpu_custom_call.1} parent=1 // pred_check_branch
      %63 = sbr.rel (0) target = $region37
    $region36: #{tpu_custom_call.1} parent=1 // pred_region
      %64 = dma.done [#allocation6], 3072
    $region37: #{tpu_custom_call.1} parent=1 // pred_fallthru
      _
    %v66 = vld [vmem:[#allocation2] sm:$0xff]
    %v67 = vld [vmem:[#allocation2 + $0x8] sm:$0xff]
    %v68 = vld [vmem:[%s0] sm:$0xff]
    %v69 = vld [vmem:[%s0 + $0x8] sm:$0xff]
    %v70 = vpack.c.bf16 %v69, %v68
    %v71 = vld [vmem:[#allocation5] sm:$0xff]
    %v72 = vld [vmem:[#allocation5 + $0x8] sm:$0xf]
    %v73 = vld [vmem:[#allocation5 + $0xc] sm:$0xff]
    %v74 = vld [vmem:[#allocation5 + $0x14] sm:$0xf]
    %v75 = vld [vmem:[#allocation5 + $0x18] sm:$0xff]
    %v76 = vld [vmem:[#allocation5 + $0x20] sm:$0xf]
    %v77 = vld [vmem:[#allocation5 + $0x24] sm:$0xff]
    %v78 = vld [vmem:[#allocation5 + $0x2c] sm:$0xf]
    %v79 = vld [vmem:[#allocation5 + $0x30] sm:$0xff]
    %v80 = vld [vmem:[#allocation5 + $0x38] sm:$0xf]
    %v81 = vld [vmem:[#allocation5 + $0x3c] sm:$0xff]
    %v82 = vld [vmem:[#allocation5 + $0x44] sm:$0xf]
    %v83 = vld [vmem:[#allocation5 + $0x48] sm:$0xff]
    %v84 = vld [vmem:[#allocation5 + $0x50] sm:$0xf]
    %v85 = vld [vmem:[#allocation5 + $0x54] sm:$0xff]
    %v86 = vld [vmem:[#allocation5 + $0x5c] sm:$0xf]
    %v87 = vld [vmem:[%s4] sm:$0x7]
    %v89 = vlaneseq
    %v90 = vshrl.u32 %v89, 7
    %v91 = vsub.s32 0, %v90
    %v92 = vrot.slane %v87, %v91
    %v93 = vlaneseq
    %v94 = vshrl.u32 %v93, 7
    %v95 = vsub.s32 1, %v94
    %v96 = vrot.slane %v87, %v95
    %v97 = vlaneseq
    %v98 = vshrl.u32 %v97, 7
    %v99 = vsub.s32 2, %v98
    %v100 = vrot.slane %v87, %v99
    %v120 = vunpack.c.l.b16 %v71
    %v121 = vunpack.c.h.b16 %v71
    %v122 = vunpack.c.l.b16 %v72
    %v123 = vunpack.c.l.b16 %v73
    %v124 = vunpack.c.h.b16 %v73
    %v125 = vunpack.c.l.b16 %v74
    %v126 = vunpack.c.l.b16 %v75
    %v127 = vunpack.c.h.b16 %v75
    %v128 = vunpack.c.l.b16 %v76
    %v129 = vunpack.c.l.b16 %v77
    %v130 = vunpack.c.h.b16 %v77
    %v131 = vunpack.c.l.b16 %v78
    %v132 = vunpack.c.l.b16 %v79
    %v133 = vunpack.c.h.b16 %v79
    %v134 = vunpack.c.l.b16 %v80
    %v135 = vunpack.c.l.b16 %v81
    %v136 = vunpack.c.h.b16 %v81
    %v137 = vunpack.c.l.b16 %v82
    %v138 = vunpack.c.l.b16 %v83
    %v139 = vunpack.c.h.b16 %v83
    %v140 = vunpack.c.l.b16 %v84
    %v141 = vunpack.c.l.b16 %v85
    %v142 = vunpack.c.h.b16 %v85
    %v143 = vunpack.c.l.b16 %v86
    %v144 = vpack.c.b16 %v123, %v120
    %v145 = vpack.c.b16 %v124, %v121
    %v146 = vpack.c.b16 %v125, %v122
    %v147 = vpack.c.b16 %v129, %v126
    %v148 = vpack.c.b16 %v130, %v127
    %v149 = vpack.c.b16 %v131, %v128
    %v150 = vpack.c.b16 %v135, %v132
    %v151 = vpack.c.b16 %v136, %v133
    %v152 = vpack.c.b16 %v137, %v134
    %v153 = vpack.c.b16 %v141, %v138
    %v154 = vpack.c.b16 %v142, %v139
    %v155 = vpack.c.b16 %v143, %v140
    %vm168 = vcmask 523264
    %v170 = vsel %vm168, %v70, 0
    %172 = vmatprep.subr.bf16.mxu0 %v145
    %173 = vmatpush1.bf16.msra.mxu0 %v144
    %174 = vmatprep.subr.bf16.mxu0 %v148
    %175 = vmatpush1.bf16.msra.mxu0 %v147
    %176 = vmatprep.subr.bf16.mxu0 %v151
    %177 = vmatpush1.bf16.msra.mxu0 %v150
    %178 = vmatprep.subr.bf16.mxu0 %v154
    %179 = vmatpush1.bf16.msra.mxu0 %v153
    %180 = vmatprep.subr.bf16.mxu0 0
    %181 = vmatpush1.bf16.msra.mxu0 0
    %182 = vmatprep.subr.bf16.mxu0 0
    %183 = vmatpush1.bf16.msra.mxu0 0
    %184 = vmatprep.subr.bf16.mxu0 0
    %185 = vmatpush1.bf16.msra.mxu0 0
    %186 = vmatprep.subr.bf16.mxu0 0
    %187 = vmatpush1.bf16.msra.mxu0 0
    %188 = vmatprep.subr.bf16.mxu0 0
    %189 = vmatpush1.bf16.msra.mxu0 0
    %190 = vmatprep.subr.bf16.mxu0 0
    %191 = vmatpush1.bf16.msra.mxu0 0
    %192 = vmatprep.subr.bf16.mxu0 0
    %193 = vmatpush1.bf16.msra.mxu0 0
    %194 = vmatprep.subr.bf16.mxu0 0
    %195 = vmatpush1.bf16.msra.mxu0 0
    %196 = vmatprep.subr.bf16.mxu0 0
    %197 = vmatpush1.bf16.msra.mxu0 0
    %198 = vmatprep.subr.bf16.mxu0 0
    %199 = vmatpush1.bf16.msra.mxu0 0
    %200 = vmatprep.subr.bf16.mxu0 0
    %201 = vmatpush1.bf16.msra.mxu0 0
    %202 = vmatprep.subr.bf16.mxu0 0
    %203 = vmatpush1.bf16.msra.mxu0 0
    %204 = vmatprep.mubr.bf16.mxu0 0
    %205 = vmatmul.mubr.bf16.gmra.mrb[0].mxu0 %v170
    %v206 = vpop.f32.mrb[0].mxu0
    %v207 = vadd.f32 %v92, %v206
    %v208 = vpop.f32.mrb[0].mxu0
    %v209 = vadd.f32 %v96, %v208
    %v210 = vpop.f32.mrb[0].mxu0
    %v211 = vadd.f32 %v92, %v210
    %v212 = vpop.f32.mrb[0].mxu0
    %v213 = vadd.f32 %v96, %v212
    %214 = vdwg.mxu0
    %215 = vmatprep.subr.bf16.mxu0 0
    %216 = vmatpush1.bf16.msra.mxu0 %v146
    %217 = vmatprep.subr.bf16.mxu0 0
    %218 = vmatpush1.bf16.msra.mxu0 %v149
    %219 = vmatprep.subr.bf16.mxu0 0
    %220 = vmatpush1.bf16.msra.mxu0 %v152
    %221 = vmatprep.subr.bf16.mxu0 0
    %222 = vmatpush1.bf16.msra.mxu0 %v155
    %223 = vmatprep.subr.bf16.mxu0 0
    %224 = vmatpush1.bf16.msra.mxu0 0
    %225 = vmatprep.subr.bf16.mxu0 0
    %226 = vmatpush1.bf16.msra.mxu0 0
    %227 = vmatprep.subr.bf16.mxu0 0
    %228 = vmatpush1.bf16.msra.mxu0 0
    %229 = vmatprep.subr.bf16.mxu0 0
    %230 = vmatpush1.bf16.msra.mxu0 0
    %231 = vmatprep.subr.bf16.mxu0 0
    %232 = vmatpush1.bf16.msra.mxu0 0
    %233 = vmatprep.subr.bf16.mxu0 0
    %234 = vmatpush1.bf16.msra.mxu0 0
    %235 = vmatprep.subr.bf16.mxu0 0
    %236 = vmatpush1.bf16.msra.mxu0 0
    %237 = vmatprep.subr.bf16.mxu0 0
    %238 = vmatpush1.bf16.msra.mxu0 0
    %239 = vmatprep.subr.bf16.mxu0 0
    %240 = vmatpush1.bf16.msra.mxu0 0
    %241 = vmatprep.subr.bf16.mxu0 0
    %242 = vmatpush1.bf16.msra.mxu0 0
    %243 = vmatprep.subr.bf16.mxu0 0
    %244 = vmatpush1.bf16.msra.mxu0 0
    %245 = vmatprep.subr.bf16.mxu0 0
    %246 = vmatpush1.bf16.msra.mxu0 0
    %247 = vmatprep.mubr.bf16.mxu0 0
    %248 = vmatmul.mubr.bf16.gmra.mrb[0].mxu0 %v170
    %v249 = vpop.f32.mrb[0].mxu0
    %v250 = vadd.f32 %v100, %v249
    %v251 = vpop.f32.mrb[0].mxu0
    %v252 = vpop.f32.mrb[0].mxu0
    %v253 = vadd.f32 %v100, %v252
    %v254 = vpop.f32.mrb[0].mxu0
    %255 = vdwg.mxu0
    %v256 = vpack.c.bf16 %v67, %v66
    %v257 = vld [vmem:[#allocation7] sm:$0xff]
    %v258 = vld [vmem:[#allocation7 + $0x8] sm:$0xf]
    %v259 = vld [vmem:[#allocation7 + $0xc] sm:$0xff]
    %v260 = vld [vmem:[#allocation7 + $0x14] sm:$0xf]
    %v261 = vld [vmem:[#allocation7 + $0x18] sm:$0xff]
    %v262 = vld [vmem:[#allocation7 + $0x20] sm:$0xf]
    %v263 = vld [vmem:[#allocation7 + $0x24] sm:$0xff]
    %v264 = vld [vmem:[#allocation7 + $0x2c] sm:$0xf]
    %v265 = vld [vmem:[#allocation7 + $0x30] sm:$0xff]
    %v266 = vld [vmem:[#allocation7 + $0x38] sm:$0xf]
    %v267 = vld [vmem:[#allocation7 + $0x3c] sm:$0xff]
    %v268 = vld [vmem:[#allocation7 + $0x44] sm:$0xf]
    %v269 = vld [vmem:[#allocation7 + $0x48] sm:$0xff]
    %v270 = vld [vmem:[#allocation7 + $0x50] sm:$0xf]
    %v271 = vld [vmem:[#allocation7 + $0x54] sm:$0xff]
    %v272 = vld [vmem:[#allocation7 + $0x5c] sm:$0xf]
    %v273 = vld [vmem:[#allocation7 + $0x60] sm:$0xff]
    %v274 = vld [vmem:[#allocation7 + $0x68] sm:$0xf]
    %v275 = vld [vmem:[#allocation7 + $0x6c] sm:$0xff]
    %v276 = vld [vmem:[#allocation7 + $0x74] sm:$0xf]
    %v277 = vld [vmem:[#allocation7 + $0x78] sm:$0xff]
    %v278 = vld [vmem:[#allocation7 + $0x80] sm:$0xf]
    %v279 = vld [vmem:[#allocation7 + $0x84] sm:$0xff]
    %v280 = vld [vmem:[#allocation7 + $0x8c] sm:$0xf]
    %v281 = vld [vmem:[#allocation7 + $0x90] sm:$0xff]
    %v282 = vld [vmem:[#allocation7 + $0x98] sm:$0xf]
    %v283 = vld [vmem:[#allocation7 + $0x9c] sm:$0xff]
    %v284 = vld [vmem:[#allocation7 + $0xa4] sm:$0xf]
    %v285 = vld [vmem:[#allocation7 + $0xa8] sm:$0xff]
    %v286 = vld [vmem:[#allocation7 + $0xb0] sm:$0xf]
    %v287 = vld [vmem:[#allocation7 + $0xb4] sm:$0xff]
    %v288 = vld [vmem:[#allocation7 + $0xbc] sm:$0xf]
    %v321 = vunpack.c.l.b16 %v257
    %v322 = vunpack.c.h.b16 %v257
    %v323 = vunpack.c.l.b16 %v258
    %v324 = vunpack.c.l.b16 %v259
    %v325 = vunpack.c.h.b16 %v259
    %v326 = vunpack.c.l.b16 %v260
    %v327 = vunpack.c.l.b16 %v261
    %v328 = vunpack.c.h.b16 %v261
    %v329 = vunpack.c.l.b16 %v262
    %v330 = vunpack.c.l.b16 %v263
    %v331 = vunpack.c.h.b16 %v263
    %v332 = vunpack.c.l.b16 %v264
    %v333 = vunpack.c.l.b16 %v265
    %v334 = vunpack.c.h.b16 %v265
    %v335 = vunpack.c.l.b16 %v266
    %v336 = vunpack.c.l.b16 %v267
    %v337 = vunpack.c.h.b16 %v267
    %v338 = vunpack.c.l.b16 %v268
    %v339 = vunpack.c.l.b16 %v269
    %v340 = vunpack.c.h.b16 %v269
    %v341 = vunpack.c.l.b16 %v270
    %v342 = vunpack.c.l.b16 %v271
    %v343 = vunpack.c.h.b16 %v271
    %v344 = vunpack.c.l.b16 %v272
    %v345 = vunpack.c.l.b16 %v273
    %v346 = vunpack.c.h.b16 %v273
    %v347 = vunpack.c.l.b16 %v274
    %v348 = vunpack.c.l.b16 %v275
    %v349 = vunpack.c.h.b16 %v275
    %v350 = vunpack.c.l.b16 %v276
    %v351 = vunpack.c.l.b16 %v277
    %v352 = vunpack.c.h.b16 %v277
    %v353 = vunpack.c.l.b16 %v278
    %v354 = vunpack.c.l.b16 %v279
    %v355 = vunpack.c.h.b16 %v279
    %v356 = vunpack.c.l.b16 %v280
    %v357 = vunpack.c.l.b16 %v281
    %v358 = vunpack.c.h.b16 %v281
    %v359 = vunpack.c.l.b16 %v282
    %v360 = vunpack.c.l.b16 %v283
    %v361 = vunpack.c.h.b16 %v283
    %v362 = vunpack.c.l.b16 %v284
    %v363 = vunpack.c.l.b16 %v285
    %v364 = vunpack.c.h.b16 %v285
    %v365 = vunpack.c.l.b16 %v286
    %v366 = vunpack.c.l.b16 %v287
    %v367 = vunpack.c.h.b16 %v287
    %v368 = vunpack.c.l.b16 %v288
    %v369 = vpack.c.b16 %v324, %v321
    %v370 = vpack.c.b16 %v325, %v322
    %v371 = vpack.c.b16 %v326, %v323
    %v372 = vpack.c.b16 %v330, %v327
    %v373 = vpack.c.b16 %v331, %v328
    %v374 = vpack.c.b16 %v332, %v329
    %v375 = vpack.c.b16 %v336, %v333
    %v376 = vpack.c.b16 %v337, %v334
    %v377 = vpack.c.b16 %v338, %v335
    %v378 = vpack.c.b16 %v342, %v339
    %v379 = vpack.c.b16 %v343, %v340
    %v380 = vpack.c.b16 %v344, %v341
    %v381 = vpack.c.b16 %v348, %v345
    %v382 = vpack.c.b16 %v349, %v346
    %v383 = vpack.c.b16 %v350, %v347
    %v384 = vpack.c.b16 %v354, %v351
    %v385 = vpack.c.b16 %v355, %v352
    %v386 = vpack.c.b16 %v356, %v353
    %v387 = vpack.c.b16 %v360, %v357
    %v388 = vpack.c.b16 %v361, %v358
    %v389 = vpack.c.b16 %v362, %v359
    %v390 = vpack.c.b16 %v366, %v363
    %v391 = vpack.c.b16 %v367, %v364
    %v392 = vpack.c.b16 %v368, %v365
    %417 = vmatprep.subr.bf16.mxu0 %v370
    %418 = vmatpush1.bf16.msra.mxu0 %v369
    %419 = vmatprep.subr.bf16.mxu0 %v373
    %420 = vmatpush1.bf16.msra.mxu0 %v372
    %421 = vmatprep.subr.bf16.mxu0 %v376
    %422 = vmatpush1.bf16.msra.mxu0 %v375
    %423 = vmatprep.subr.bf16.mxu0 %v379
    %424 = vmatpush1.bf16.msra.mxu0 %v378
    %425 = vmatprep.subr.bf16.mxu0 %v382
    %426 = vmatpush1.bf16.msra.mxu0 %v381
    %427 = vmatprep.subr.bf16.mxu0 %v385
    %428 = vmatpush1.bf16.msra.mxu0 %v384
    %429 = vmatprep.subr.bf16.mxu0 %v388
    %430 = vmatpush1.bf16.msra.mxu0 %v387
    %431 = vmatprep.subr.bf16.mxu0 %v391
    %432 = vmatpush1.bf16.msra.mxu0 %v390
    %433 = vmatprep.subr.bf16.mxu0 0
    %434 = vmatpush1.bf16.msra.mxu0 0
    %435 = vmatprep.subr.bf16.mxu0 0
    %436 = vmatpush1.bf16.msra.mxu0 0
    %437 = vmatprep.subr.bf16.mxu0 0
    %438 = vmatpush1.bf16.msra.mxu0 0
    %439 = vmatprep.subr.bf16.mxu0 0
    %440 = vmatpush1.bf16.msra.mxu0 0
    %441 = vmatprep.subr.bf16.mxu0 0
    %442 = vmatpush1.bf16.msra.mxu0 0
    %443 = vmatprep.subr.bf16.mxu0 0
    %444 = vmatpush1.bf16.msra.mxu0 0
    %445 = vmatprep.subr.bf16.mxu0 0
    %446 = vmatpush1.bf16.msra.mxu0 0
    %447 = vmatprep.subr.bf16.mxu0 0
    %448 = vmatpush1.bf16.msra.mxu0 0
    %449 = vmatprep.mubr.bf16.mxu0 0
    %450 = vmatmul.mubr.bf16.gmra.mrb[0].mxu0 %v256
    %v451 = vpop.f32.mrb[0].mxu0
    %v452 = vadd.f32 0.0, %v451
    %v453 = vpop.f32.mrb[0].mxu0
    %v454 = vadd.f32 0.0, %v453
    %v455 = vpop.f32.mrb[0].mxu0
    %v456 = vadd.f32 0.0, %v455
    %v457 = vpop.f32.mrb[0].mxu0
    %v458 = vadd.f32 0.0, %v457
    %459 = vdwg.mxu0
    %460 = vmatprep.subr.bf16.mxu0 0
    %461 = vmatpush1.bf16.msra.mxu0 %v371
    %462 = vmatprep.subr.bf16.mxu0 0
    %463 = vmatpush1.bf16.msra.mxu0 %v374
    %464 = vmatprep.subr.bf16.mxu0 0
    %465 = vmatpush1.bf16.msra.mxu0 %v377
    %466 = vmatprep.subr.bf16.mxu0 0
    %467 = vmatpush1.bf16.msra.mxu0 %v380
    %468 = vmatprep.subr.bf16.mxu0 0
    %469 = vmatpush1.bf16.msra.mxu0 %v383
    %470 = vmatprep.subr.bf16.mxu0 0
    %471 = vmatpush1.bf16.msra.mxu0 %v386
    %472 = vmatprep.subr.bf16.mxu0 0
    %473 = vmatpush1.bf16.msra.mxu0 %v389
    %474 = vmatprep.subr.bf16.mxu0 0
    %475 = vmatpush1.bf16.msra.mxu0 %v392
    %476 = vmatprep.subr.bf16.mxu0 0
    %477 = vmatpush1.bf16.msra.mxu0 0
    %478 = vmatprep.subr.bf16.mxu0 0
    %479 = vmatpush1.bf16.msra.mxu0 0
    %480 = vmatprep.subr.bf16.mxu0 0
    %481 = vmatpush1.bf16.msra.mxu0 0
    %482 = vmatprep.subr.bf16.mxu0 0
    %483 = vmatpush1.bf16.msra.mxu0 0
    %484 = vmatprep.subr.bf16.mxu0 0
    %485 = vmatpush1.bf16.msra.mxu0 0
    %486 = vmatprep.subr.bf16.mxu0 0
    %487 = vmatpush1.bf16.msra.mxu0 0
    %488 = vmatprep.subr.bf16.mxu0 0
    %489 = vmatpush1.bf16.msra.mxu0 0
    %490 = vmatprep.subr.bf16.mxu0 0
    %491 = vmatpush1.bf16.msra.mxu0 0
    %492 = vmatprep.mubr.bf16.mxu0 0
    %493 = vmatmul.mubr.bf16.gmra.mrb[0].mxu0 %v256
    %v494 = vpop.f32.mrb[0].mxu0
    %v495 = vadd.f32 0.0, %v494
    %v496 = vpop.f32.mrb[0].mxu0
    %v497 = vpop.f32.mrb[0].mxu0
    %v498 = vadd.f32 0.0, %v497
    %v499 = vpop.f32.mrb[0].mxu0
    %500 = vdwg.mxu0
    %v501 = vadd.f32 %v207, %v452
    %v502 = vadd.f32 %v211, %v456
    %v503 = vxor.u32 %v501, 2147483648
    %v504 = vxor.u32 %v502, 2147483648
    %v505 = vmul.f32 %v503, 1.442695
    %v506 = vpow.pop %v505
    %v507 = vmul.f32 %v504, 1.442695
    %v508 = vpow.pop %v507
    %v509 = vadd.f32 %v506, 1.0
    %v510 = vadd.f32 %v508, 1.0
    %v511 = vrcp.pop %v509
    %v512 = vmul.f32 1.0, %v511
    %v513 = vrcp.pop %v510
    %v514 = vmul.f32 1.0, %v513
    %v515 = vadd.f32 %v209, %v454
    %v516 = vadd.f32 %v213, %v458
    %v517 = vxor.u32 %v515, 2147483648
    %v518 = vxor.u32 %v516, 2147483648
    %v519 = vmul.f32 %v517, 1.442695
    %v520 = vpow.pop %v519
    %v521 = vmul.f32 %v518, 1.442695
    %v522 = vpow.pop %v521
    %v523 = vadd.f32 %v520, 1.0
    %v524 = vadd.f32 %v522, 1.0
    %v525 = vrcp.pop %v523
    %v526 = vmul.f32 1.0, %v525
    %v527 = vrcp.pop %v524
    %v528 = vmul.f32 1.0, %v527
    %v529 = vld [vmem:[%s5] sm:$0x1]
    %v531 = vlaneseq
    %v532 = vshrl.u32 %v531, 7
    %v533 = vsub.s32 0, %v532
    %v534 = vrot.slane %v529, %v533
    %v536 = vadd.f32 %v495, %v534
    %v537 = vadd.f32 %v498, %v534
    %v538 = vmul.f32 %v512, %v536
    %v539 = vmul.f32 %v514, %v537
    %v540 = vadd.f32 %v250, %v538
    %v541 = vadd.f32 %v253, %v539
    %v542 = vtanh.pop %v540
    %v543 = vtanh.pop %v541
    %v544 = vsub.f32 %v66, %v542
    %v545 = vsub.f32 %v67, %v543
    %v546 = vmul.f32 %v526, %v544
    %v547 = vmul.f32 %v528, %v545
    %v548 = vadd.f32 %v542, %v546
    %v549 = vadd.f32 %v543, %v547
    %550 = vst [vmem:[#allocation8] sm:$0xff] %v548
    %551 = vst [vmem:[#allocation8 + $0x8] sm:$0xff] %v549
    // Predicated region
    $region38: #{tpu_custom_call.1} parent=1 // pred_check
      _
    $region39: #{tpu_custom_call.1} parent=1 // pred_check_branch
      %553 = sbr.rel (0) target = $region41
    $region40: #{tpu_custom_call.1} parent=1 // pred_region
      %s555 = ssub.s32 256, 256
      %556 = vsyncadd [#allocation4], %s555
      %s557 = sshll.u32 [#allocation8], 4
      %s558 = int_to_ptr.vmem [resolvable:$true] %s557
      %563 = dma.vmem_to_hbm [thread:$0]  %s558, 256, %s6, [#allocation4], 128, 128, 8
    $region41: #{tpu_custom_call.1} parent=1 // pred_fallthru
      _
    // Predicated region
    $region42: #{tpu_custom_call.1} parent=1 // pred_check
      _
    $region43: #{tpu_custom_call.1} parent=1 // pred_check_branch
      %565 = sbr.rel (0) target = $region45
    $region44: #{tpu_custom_call.1} parent=1 // pred_region
      %566 = dma.done [#allocation4], 256
    $region45: #{tpu_custom_call.1} parent=1 // pred_fallthru
      _
    %567 = vsyncpa [#allocation3], 1
    %568 = vsyncpa [#allocation6], 1
    %569 = vsyncpa [#allocation4], 1

// kernel: tpu_custom_call.1
$region0: #{tpu_custom_call.1}
  #allocation0 [shape = 'u32[]', space=smem, size = 0x4, offset = 0x4, fixed_abs, tag = 'smem constant byte address 0x4 - core index']
  #allocation1 [shape = 'u32[144,128]{1,0:T(1,128)}', space=vmem, size = 0x12000, scoped, tag = 'internal scratch']
  %s0 = inlined_call_operand.vmem [shape: f32[16,64], index: 0, kind: input, shape index: {}]
  %s1 = inlined_call_operand.hbm [shape: f32[16,128], index: 1, kind: input, shape index: {}, may-alias: {1,6}]
  %s2 = inlined_call_operand.hbm [shape: bf16[64,384], index: 2, kind: input, shape index: {}]
  %s3 = inlined_call_operand.hbm [shape: bf16[128,384], index: 3, kind: input, shape index: {}]
  %s4 = inlined_call_operand.vmem [shape: f32[1,384], index: 4, kind: input, shape index: {}]
  %s5 = inlined_call_operand.vmem [shape: f32[1,128], index: 5, kind: input, shape index: {}]
  %s6 = inlined_call_operand.hbm [shape: f32[16,128], index: 6, kind: output, shape index: {}, may-alias: {1,6}]
  %s7 = sld [smem:[#allocation0]]
  $region46: #{tpu_custom_call.1} parent=0
    _
  %s9 = ssub.s32 1, %s7
  %s10 = scalar_select 0, %s9, %s7
  $region1: #{tpu_custom_call.1} parent=0
    #allocation2 [shape = 'u8[8192]{0}', space=vmem, size = 0x2000, scoped, tag = 'input window, operand 1, single buffered']
    #allocation3 [shape = 's32[1]{0}', space=sflag, size = 0x4, scoped, tag = 'scoped memory for tpu_custom_call.1']
    #allocation4 [shape = 's32[1]{0}', space=sflag, size = 0x4, scoped, tag = 'scoped memory for tpu_custom_call.1']
    #allocation5 [shape = 'u8[49152]{0}', space=vmem, size = 0xc000, scoped, tag = 'input window, operand 2, single buffered']
    #allocation6 [shape = 's32[1]{0}', space=sflag, size = 0x4, scoped, tag = 'scoped memory for tpu_custom_call.1']
    #allocation7 [shape = 'u8[98304]{0}', space=vmem, size = 0x18000, scoped, tag = 'input window, operand 3, single buffered']
    #allocation8 [shape = 'u8[8192]{0}', space=vmem, size = 0x2000, scoped, tag = 'output window, operand 0, single buffered']
    %11 = vsyncpa [#allocation3], 0
    %12 = vsyncpa [#allocation6], 0
    %13 = vsyncpa [#allocation4], 0
    // Predicated region
    $region2: #{tpu_custom_call.1} parent=1 // pred_check
      _
    $region3: #{tpu_custom_call.1} parent=1 // pred_check_branch
      %15 = sbr.rel (0) target = $region5
    $region4: #{tpu_custom_call.1} parent=1 // pred_region
      _
    $region5: #{tpu_custom_call.1} parent=1 // pred_fallthru
      _
    // Predicated region
    $region6: #{tpu_custom_call.1} parent=1 // pred_check
      _
    $region7: #{tpu_custom_call.1} parent=1 // pred_check_branch
      %17 = sbr.rel (0) target = $region9
    $region8: #{tpu_custom_call.1} parent=1 // pred_region
      %s19 = ssub.s32 256, 256
      %20 = vsyncadd [#allocation3], %s19
      %s21 = sshll.u32 [#allocation2], 4
      %s22 = int_to_ptr.vmem [resolvable:$true] %s21
      %27 = dma.hbm_to_vmem [thread:$0]  %s1, 256, %s22, [#allocation3], 128, 128, 8
    $region9: #{tpu_custom_call.1} parent=1 // pred_fallthru
      _
    // Predicated region
    $region10: #{tpu_custom_call.1} parent=1 // pred_check
      _
    $region11: #{tpu_custom_call.1} parent=1 // pred_check_branch
      %29 = sbr.rel (0) target = $region13
    $region12: #{tpu_custom_call.1} parent=1 // pred_region
      %s31 = ssub.s32 1536, 1536
      %32 = vsyncadd [#allocation6], %s31
      %s33 = sshll.u32 [#allocation5], 4
      %s34 = int_to_ptr.vmem [resolvable:$true] %s33
      %39 = dma.hbm_to_vmem [thread:$0]  %s2, 1536, %s34, [#allocation6], 192, 192, 12
    $region13: #{tpu_custom_call.1} parent=1 // pred_fallthru
      _
    // Predicated region
    $region14: #{tpu_custom_call.1} parent=1 // pred_check
      _
    $region15: #{tpu_custom_call.1} parent=1 // pred_check_branch
      %41 = sbr.rel (0) target = $region17
    $region16: #{tpu_custom_call.1} parent=1 // pred_region
      %s43 = ssub.s32 3072, 3072
      %44 = vsyncadd [#allocation6], %s43
      %s45 = sshll.u32 [#allocation7], 4
      %s46 = int_to_ptr.vmem [resolvable:$true] %s45
      %51 = dma.hbm_to_vmem [thread:$0]  %s3, 3072, %s46, [#allocation6], 192, 192, 12
    $region17: #{tpu_custom_call.1} parent=1 // pred_fallthru
      _
    // Predicated region
    $region18: #{tpu_custom_call.1} parent=1 // pred_check
      _
    $region19: #{tpu_custom_call.1} parent=1 // pred_check_branch
      %53 = sbr.rel (0) target = $region21
    $region20: #{tpu_custom_call.1} parent=1 // pred_region
      _
    $region21: #{tpu_custom_call.1} parent=1 // pred_fallthru
      _
    // Predicated region
    $region22: #{tpu_custom_call.1} parent=1 // pred_check
      _
    $region23: #{tpu_custom_call.1} parent=1 // pred_check_branch
      %55 = sbr.rel (0) target = $region25
    $region24: #{tpu_custom_call.1} parent=1 // pred_region
      _
    $region25: #{tpu_custom_call.1} parent=1 // pred_fallthru
      _
    // Predicated region
    $region26: #{tpu_custom_call.1} parent=1 // pred_check
      _
    $region27: #{tpu_custom_call.1} parent=1 // pred_check_branch
      %57 = sbr.rel (0) target = $region29
    $region28: #{tpu_custom_call.1} parent=1 // pred_region
      %58 = dma.done [#allocation3], 256
    $region29: #{tpu_custom_call.1} parent=1 // pred_fallthru
      _
    // Predicated region
    $region30: #{tpu_custom_call.1} parent=1 // pred_check
      _
    $region31: #{tpu_custom_call.1} parent=1 // pred_check_branch
      %60 = sbr.rel (0) target = $region33
    $region32: #{tpu_custom_call.1} parent=1 // pred_region
      %61 = dma.done [#allocation6], 1536
    $region33: #{tpu_custom_call.1} parent=1 // pred_fallthru
      _
    // Predicated region
    $region34: #{tpu_custom_call.1} parent=1 // pred_check
      _
    $region35: #{tpu_custom_call.1} parent=1 // pred_check_branch
      %63 = sbr.rel (0) target = $region37
    $region36: #{tpu_custom_call.1} parent=1 // pred_region
      %64 = dma.done [#allocation6], 3072
    $region37: #{tpu_custom_call.1} parent=1 // pred_fallthru
      _
    %v66 = vld [vmem:[#allocation2] sm:$0xff]
    %v67 = vld [vmem:[#allocation2 + $0x8] sm:$0xff]
    %v68 = vld [vmem:[%s0] sm:$0xff]
    %v69 = vld [vmem:[%s0 + $0x8] sm:$0xff]
    %v70 = vpack.c.bf16 %v69, %v68
    %v71 = vld [vmem:[#allocation5] sm:$0xff]
    %v72 = vld [vmem:[#allocation5 + $0x8] sm:$0xf]
    %v73 = vld [vmem:[#allocation5 + $0xc] sm:$0xff]
    %v74 = vld [vmem:[#allocation5 + $0x14] sm:$0xf]
    %v75 = vld [vmem:[#allocation5 + $0x18] sm:$0xff]
    %v76 = vld [vmem:[#allocation5 + $0x20] sm:$0xf]
    %v77 = vld [vmem:[#allocation5 + $0x24] sm:$0xff]
    %v78 = vld [vmem:[#allocation5 + $0x2c] sm:$0xf]
    %v79 = vld [vmem:[#allocation5 + $0x30] sm:$0xff]
    %v80 = vld [vmem:[#allocation5 + $0x38] sm:$0xf]
    %v81 = vld [vmem:[#allocation5 + $0x3c] sm:$0xff]
    %v82 = vld [vmem:[#allocation5 + $0x44] sm:$0xf]
    %v83 = vld [vmem:[#allocation5 + $0x48] sm:$0xff]
    %v84 = vld [vmem:[#allocation5 + $0x50] sm:$0xf]
    %v85 = vld [vmem:[#allocation5 + $0x54] sm:$0xff]
    %v86 = vld [vmem:[#allocation5 + $0x5c] sm:$0xf]
    %v87 = vld [vmem:[%s4] sm:$0x7]
    %v89 = vlaneseq
    %v90 = vshrl.u32 %v89, 7
    %v91 = vsub.s32 0, %v90
    %v92 = vrot.slane %v87, %v91
    %v93 = vlaneseq
    %v94 = vshrl.u32 %v93, 7
    %v95 = vsub.s32 1, %v94
    %v96 = vrot.slane %v87, %v95
    %v97 = vlaneseq
    %v98 = vshrl.u32 %v97, 7
    %v99 = vsub.s32 2, %v98
    %v100 = vrot.slane %v87, %v99
    %v120 = vunpack.c.l.b16 %v71
    %v121 = vunpack.c.h.b16 %v71
    %v122 = vunpack.c.l.b16 %v72
    %v123 = vunpack.c.l.b16 %v73
    %v124 = vunpack.c.h.b16 %v73
    %v125 = vunpack.c.l.b16 %v74
    %v126 = vunpack.c.l.b16 %v75
    %v127 = vunpack.c.h.b16 %v75
    %v128 = vunpack.c.l.b16 %v76
    %v129 = vunpack.c.l.b16 %v77
    %v130 = vunpack.c.h.b16 %v77
    %v131 = vunpack.c.l.b16 %v78
    %v132 = vunpack.c.l.b16 %v79
    %v133 = vunpack.c.h.b16 %v79
    %v134 = vunpack.c.l.b16 %v80
    %v135 = vunpack.c.l.b16 %v81
    %v136 = vunpack.c.h.b16 %v81
    %v137 = vunpack.c.l.b16 %v82
    %v138 = vunpack.c.l.b16 %v83
    %v139 = vunpack.c.h.b16 %v83
    %v140 = vunpack.c.l.b16 %v84
    %v141 = vunpack.c.l.b16 %v85
    %v142 = vunpack.c.h.b16 %v85
    %v143 = vunpack.c.l.b16 %v86
    %v144 = vpack.c.b16 %v123, %v120
    %v145 = vpack.c.b16 %v124, %v121
    %v146 = vpack.c.b16 %v125, %v122
    %v147 = vpack.c.b16 %v129, %v126
    %v148 = vpack.c.b16 %v130, %v127
    %v149 = vpack.c.b16 %v131, %v128
    %v150 = vpack.c.b16 %v135, %v132
    %v151 = vpack.c.b16 %v136, %v133
    %v152 = vpack.c.b16 %v137, %v134
    %v153 = vpack.c.b16 %v141, %v138
    %v154 = vpack.c.b16 %v142, %v139
    %v155 = vpack.c.b16 %v143, %v140
    %vm168 = vcmask 523264
    %v170 = vsel %vm168, %v70, 0
    %172 = vmatprep.subr.bf16.mxu0 %v145
    %173 = vmatpush1.bf16.msra.mxu0 %v144
    %174 = vmatprep.subr.bf16.mxu0 %v148
    %175 = vmatpush1.bf16.msra.mxu0 %v147
    %176 = vmatprep.subr.bf16.mxu0 %v151
    %177 = vmatpush1.bf16.msra.mxu0 %v150
    %178 = vmatprep.subr.bf16.mxu0 %v154
    %179 = vmatpush1.bf16.msra.mxu0 %v153
    %180 = vmatprep.subr.bf16.mxu0 0
    %181 = vmatpush1.bf16.msra.mxu0 0
    %182 = vmatprep.subr.bf16.mxu0 0
    %183 = vmatpush1.bf16.msra.mxu0 0
    %184 = vmatprep.subr.bf16.mxu0 0
    %185 = vmatpush1.bf16.msra.mxu0 0
    %186 = vmatprep.subr.bf16.mxu0 0
    %187 = vmatpush1.bf16.msra.mxu0 0
    %188 = vmatprep.subr.bf16.mxu0 0
    %189 = vmatpush1.bf16.msra.mxu0 0
    %190 = vmatprep.subr.bf16.mxu0 0
    %191 = vmatpush1.bf16.msra.mxu0 0
    %192 = vmatprep.subr.bf16.mxu0 0
    %193 = vmatpush1.bf16.msra.mxu0 0
    %194 = vmatprep.subr.bf16.mxu0 0
    %195 = vmatpush1.bf16.msra.mxu0 0
    %196 = vmatprep.subr.bf16.mxu0 0
    %197 = vmatpush1.bf16.msra.mxu0 0
    %198 = vmatprep.subr.bf16.mxu0 0
    %199 = vmatpush1.bf16.msra.mxu0 0
    %200 = vmatprep.subr.bf16.mxu0 0
    %201 = vmatpush1.bf16.msra.mxu0 0
    %202 = vmatprep.subr.bf16.mxu0 0
    %203 = vmatpush1.bf16.msra.mxu0 0
    %204 = vmatprep.mubr.bf16.mxu0 0
    %205 = vmatmul.mubr.bf16.gmra.mrb[0].mxu0 %v170
    %v206 = vpop.f32.mrb[0].mxu0
    %v207 = vadd.f32 %v92, %v206
    %v208 = vpop.f32.mrb[0].mxu0
    %v209 = vadd.f32 %v96, %v208
    %v210 = vpop.f32.mrb[0].mxu0
    %v211 = vadd.f32 %v92, %v210
    %v212 = vpop.f32.mrb[0].mxu0
    %v213 = vadd.f32 %v96, %v212
    %214 = vdwg.mxu0
    %215 = vmatprep.subr.bf16.mxu0 0
    %216 = vmatpush1.bf16.msra.mxu0 %v146
    %217 = vmatprep.subr.bf16.mxu0 0
    %218 = vmatpush1.bf16.msra.mxu0 %v149
    %219 = vmatprep.subr.bf16.mxu0 0
    %220 = vmatpush1.bf16.msra.mxu0 %v152
    %221 = vmatprep.subr.bf16.mxu0 0
    %222 = vmatpush1.bf16.msra.mxu0 %v155
    %223 = vmatprep.subr.bf16.mxu0 0
    %224 = vmatpush1.bf16.msra.mxu0 0
    %225 = vmatprep.subr.bf16.mxu0 0
    %226 = vmatpush1.bf16.msra.mxu0 0
    %227 = vmatprep.subr.bf16.mxu0 0
    %228 = vmatpush1.bf16.msra.mxu0 0
    %229 = vmatprep.subr.bf16.mxu0 0
    %230 = vmatpush1.bf16.msra.mxu0 0
    %231 = vmatprep.subr.bf16.mxu0 0
    %232 = vmatpush1.bf16.msra.mxu0 0
    %233 = vmatprep.subr.bf16.mxu0 0
    %234 = vmatpush1.bf16.msra.mxu0 0
    %235 = vmatprep.subr.bf16.mxu0 0
    %236 = vmatpush1.bf16.msra.mxu0 0
    %237 = vmatprep.subr.bf16.mxu0 0
    %238 = vmatpush1.bf16.msra.mxu0 0
    %239 = vmatprep.subr.bf16.mxu0 0
    %240 = vmatpush1.bf16.msra.mxu0 0
    %241 = vmatprep.subr.bf16.mxu0 0
    %242 = vmatpush1.bf16.msra.mxu0 0
    %243 = vmatprep.subr.bf16.mxu0 0
    %244 = vmatpush1.bf16.msra.mxu0 0
    %245 = vmatprep.subr.bf16.mxu0 0
    %246 = vmatpush1.bf16.msra.mxu0 0
    %247 = vmatprep.mubr.bf16.mxu0 0
    %248 = vmatmul.mubr.bf16.gmra.mrb[0].mxu0 %v170
    %v249 = vpop.f32.mrb[0].mxu0
    %v250 = vadd.f32 %v100, %v249
    %v251 = vpop.f32.mrb[0].mxu0
    %v252 = vpop.f32.mrb[0].mxu0
    %v253 = vadd.f32 %v100, %v252
    %v254 = vpop.f32.mrb[0].mxu0
    %255 = vdwg.mxu0
    %v256 = vpack.c.bf16 %v67, %v66
    %v257 = vld [vmem:[#allocation7] sm:$0xff]
    %v258 = vld [vmem:[#allocation7 + $0x8] sm:$0xf]
    %v259 = vld [vmem:[#allocation7 + $0xc] sm:$0xff]
    %v260 = vld [vmem:[#allocation7 + $0x14] sm:$0xf]
    %v261 = vld [vmem:[#allocation7 + $0x18] sm:$0xff]
    %v262 = vld [vmem:[#allocation7 + $0x20] sm:$0xf]
    %v263 = vld [vmem:[#allocation7 + $0x24] sm:$0xff]
    %v264 = vld [vmem:[#allocation7 + $0x2c] sm:$0xf]
    %v265 = vld [vmem:[#allocation7 + $0x30] sm:$0xff]
    %v266 = vld [vmem:[#allocation7 + $0x38] sm:$0xf]
    %v267 = vld [vmem:[#allocation7 + $0x3c] sm:$0xff]
    %v268 = vld [vmem:[#allocation7 + $0x44] sm:$0xf]
    %v269 = vld [vmem:[#allocation7 + $0x48] sm:$0xff]
    %v270 = vld [vmem:[#allocation7 + $0x50] sm:$0xf]
    %v271 = vld [vmem:[#allocation7 + $0x54] sm:$0xff]
    %v272 = vld [vmem:[#allocation7 + $0x5c] sm:$0xf]
    %v273 = vld [vmem:[#allocation7 + $0x60] sm:$0xff]
    %v274 = vld [vmem:[#allocation7 + $0x68] sm:$0xf]
    %v275 = vld [vmem:[#allocation7 + $0x6c] sm:$0xff]
    %v276 = vld [vmem:[#allocation7 + $0x74] sm:$0xf]
    %v277 = vld [vmem:[#allocation7 + $0x78] sm:$0xff]
    %v278 = vld [vmem:[#allocation7 + $0x80] sm:$0xf]
    %v279 = vld [vmem:[#allocation7 + $0x84] sm:$0xff]
    %v280 = vld [vmem:[#allocation7 + $0x8c] sm:$0xf]
    %v281 = vld [vmem:[#allocation7 + $0x90] sm:$0xff]
    %v282 = vld [vmem:[#allocation7 + $0x98] sm:$0xf]
    %v283 = vld [vmem:[#allocation7 + $0x9c] sm:$0xff]
    %v284 = vld [vmem:[#allocation7 + $0xa4] sm:$0xf]
    %v285 = vld [vmem:[#allocation7 + $0xa8] sm:$0xff]
    %v286 = vld [vmem:[#allocation7 + $0xb0] sm:$0xf]
    %v287 = vld [vmem:[#allocation7 + $0xb4] sm:$0xff]
    %v288 = vld [vmem:[#allocation7 + $0xbc] sm:$0xf]
    %v321 = vunpack.c.l.b16 %v257
    %v322 = vunpack.c.h.b16 %v257
    %v323 = vunpack.c.l.b16 %v258
    %v324 = vunpack.c.l.b16 %v259
    %v325 = vunpack.c.h.b16 %v259
    %v326 = vunpack.c.l.b16 %v260
    %v327 = vunpack.c.l.b16 %v261
    %v328 = vunpack.c.h.b16 %v261
    %v329 = vunpack.c.l.b16 %v262
    %v330 = vunpack.c.l.b16 %v263
    %v331 = vunpack.c.h.b16 %v263
    %v332 = vunpack.c.l.b16 %v264
    %v333 = vunpack.c.l.b16 %v265
    %v334 = vunpack.c.h.b16 %v265
    %v335 = vunpack.c.l.b16 %v266
    %v336 = vunpack.c.l.b16 %v267
    %v337 = vunpack.c.h.b16 %v267
    %v338 = vunpack.c.l.b16 %v268
    %v339 = vunpack.c.l.b16 %v269
    %v340 = vunpack.c.h.b16 %v269
    %v341 = vunpack.c.l.b16 %v270
    %v342 = vunpack.c.l.b16 %v271
    %v343 = vunpack.c.h.b16 %v271
    %v344 = vunpack.c.l.b16 %v272
    %v345 = vunpack.c.l.b16 %v273
    %v346 = vunpack.c.h.b16 %v273
    %v347 = vunpack.c.l.b16 %v274
    %v348 = vunpack.c.l.b16 %v275
    %v349 = vunpack.c.h.b16 %v275
    %v350 = vunpack.c.l.b16 %v276
    %v351 = vunpack.c.l.b16 %v277
    %v352 = vunpack.c.h.b16 %v277
    %v353 = vunpack.c.l.b16 %v278
    %v354 = vunpack.c.l.b16 %v279
    %v355 = vunpack.c.h.b16 %v279
    %v356 = vunpack.c.l.b16 %v280
    %v357 = vunpack.c.l.b16 %v281
    %v358 = vunpack.c.h.b16 %v281
    %v359 = vunpack.c.l.b16 %v282
    %v360 = vunpack.c.l.b16 %v283
    %v361 = vunpack.c.h.b16 %v283
    %v362 = vunpack.c.l.b16 %v284
    %v363 = vunpack.c.l.b16 %v285
    %v364 = vunpack.c.h.b16 %v285
    %v365 = vunpack.c.l.b16 %v286
    %v366 = vunpack.c.l.b16 %v287
    %v367 = vunpack.c.h.b16 %v287
    %v368 = vunpack.c.l.b16 %v288
    %v369 = vpack.c.b16 %v324, %v321
    %v370 = vpack.c.b16 %v325, %v322
    %v371 = vpack.c.b16 %v326, %v323
    %v372 = vpack.c.b16 %v330, %v327
    %v373 = vpack.c.b16 %v331, %v328
    %v374 = vpack.c.b16 %v332, %v329
    %v375 = vpack.c.b16 %v336, %v333
    %v376 = vpack.c.b16 %v337, %v334
    %v377 = vpack.c.b16 %v338, %v335
    %v378 = vpack.c.b16 %v342, %v339
    %v379 = vpack.c.b16 %v343, %v340
    %v380 = vpack.c.b16 %v344, %v341
    %v381 = vpack.c.b16 %v348, %v345
    %v382 = vpack.c.b16 %v349, %v346
    %v383 = vpack.c.b16 %v350, %v347
    %v384 = vpack.c.b16 %v354, %v351
    %v385 = vpack.c.b16 %v355, %v352
    %v386 = vpack.c.b16 %v356, %v353
    %v387 = vpack.c.b16 %v360, %v357
    %v388 = vpack.c.b16 %v361, %v358
    %v389 = vpack.c.b16 %v362, %v359
    %v390 = vpack.c.b16 %v366, %v363
    %v391 = vpack.c.b16 %v367, %v364
    %v392 = vpack.c.b16 %v368, %v365
    %417 = vmatprep.subr.bf16.mxu0 %v370
    %418 = vmatpush1.bf16.msra.mxu0 %v369
    %419 = vmatprep.subr.bf16.mxu0 %v373
    %420 = vmatpush1.bf16.msra.mxu0 %v372
    %421 = vmatprep.subr.bf16.mxu0 %v376
    %422 = vmatpush1.bf16.msra.mxu0 %v375
    %423 = vmatprep.subr.bf16.mxu0 %v379
    %424 = vmatpush1.bf16.msra.mxu0 %v378
    %425 = vmatprep.subr.bf16.mxu0 %v382
    %426 = vmatpush1.bf16.msra.mxu0 %v381
    %427 = vmatprep.subr.bf16.mxu0 %v385
    %428 = vmatpush1.bf16.msra.mxu0 %v384
    %429 = vmatprep.subr.bf16.mxu0 %v388
    %430 = vmatpush1.bf16.msra.mxu0 %v387
    %431 = vmatprep.subr.bf16.mxu0 %v391
    %432 = vmatpush1.bf16.msra.mxu0 %v390
    %433 = vmatprep.subr.bf16.mxu0 0
    %434 = vmatpush1.bf16.msra.mxu0 0
    %435 = vmatprep.subr.bf16.mxu0 0
    %436 = vmatpush1.bf16.msra.mxu0 0
    %437 = vmatprep.subr.bf16.mxu0 0
    %438 = vmatpush1.bf16.msra.mxu0 0
    %439 = vmatprep.subr.bf16.mxu0 0
    %440 = vmatpush1.bf16.msra.mxu0 0
    %441 = vmatprep.subr.bf16.mxu0 0
    %442 = vmatpush1.bf16.msra.mxu0 0
    %443 = vmatprep.subr.bf16.mxu0 0
    %444 = vmatpush1.bf16.msra.mxu0 0
    %445 = vmatprep.subr.bf16.mxu0 0
    %446 = vmatpush1.bf16.msra.mxu0 0
    %447 = vmatprep.subr.bf16.mxu0 0
    %448 = vmatpush1.bf16.msra.mxu0 0
    %449 = vmatprep.mubr.bf16.mxu0 0
    %450 = vmatmul.mubr.bf16.gmra.mrb[0].mxu0 %v256
    %v451 = vpop.f32.mrb[0].mxu0
    %v452 = vadd.f32 0.0, %v451
    %v453 = vpop.f32.mrb[0].mxu0
    %v454 = vadd.f32 0.0, %v453
    %v455 = vpop.f32.mrb[0].mxu0
    %v456 = vadd.f32 0.0, %v455
    %v457 = vpop.f32.mrb[0].mxu0
    %v458 = vadd.f32 0.0, %v457
    %459 = vdwg.mxu0
    %460 = vmatprep.subr.bf16.mxu0 0
    %461 = vmatpush1.bf16.msra.mxu0 %v371
    %462 = vmatprep.subr.bf16.mxu0 0
    %463 = vmatpush1.bf16.msra.mxu0 %v374
    %464 = vmatprep.subr.bf16.mxu0 0
    %465 = vmatpush1.bf16.msra.mxu0 %v377
    %466 = vmatprep.subr.bf16.mxu0 0
    %467 = vmatpush1.bf16.msra.mxu0 %v380
    %468 = vmatprep.subr.bf16.mxu0 0
    %469 = vmatpush1.bf16.msra.mxu0 %v383
    %470 = vmatprep.subr.bf16.mxu0 0
    %471 = vmatpush1.bf16.msra.mxu0 %v386
    %472 = vmatprep.subr.bf16.mxu0 0
    %473 = vmatpush1.bf16.msra.mxu0 %v389
    %474 = vmatprep.subr.bf16.mxu0 0
    %475 = vmatpush1.bf16.msra.mxu0 %v392
    %476 = vmatprep.subr.bf16.mxu0 0
    %477 = vmatpush1.bf16.msra.mxu0 0
    %478 = vmatprep.subr.bf16.mxu0 0
    %479 = vmatpush1.bf16.msra.mxu0 0
    %480 = vmatprep.subr.bf16.mxu0 0
    %481 = vmatpush1.bf16.msra.mxu0 0
    %482 = vmatprep.subr.bf16.mxu0 0
    %483 = vmatpush1.bf16.msra.mxu0 0
    %484 = vmatprep.subr.bf16.mxu0 0
    %485 = vmatpush1.bf16.msra.mxu0 0
    %486 = vmatprep.subr.bf16.mxu0 0
    %487 = vmatpush1.bf16.msra.mxu0 0
    %488 = vmatprep.subr.bf16.mxu0 0
    %489 = vmatpush1.bf16.msra.mxu0 0
    %490 = vmatprep.subr.bf16.mxu0 0
    %491 = vmatpush1.bf16.msra.mxu0 0
    %492 = vmatprep.mubr.bf16.mxu0 0
    %493 = vmatmul.mubr.bf16.gmra.mrb[0].mxu0 %v256
    %v494 = vpop.f32.mrb[0].mxu0
    %v495 = vadd.f32 0.0, %v494
    %v496 = vpop.f32.mrb[0].mxu0
    %v497 = vpop.f32.mrb[0].mxu0
    %v498 = vadd.f32 0.0, %v497
    %v499 = vpop.f32.mrb[0].mxu0
    %500 = vdwg.mxu0
    %v501 = vadd.f32 %v207, %v452
    %v502 = vadd.f32 %v211, %v456
    %v503 = vxor.u32 %v501, 2147483648
    %v504 = vxor.u32 %v502, 2147483648
    %v505 = vmul.f32 %v503, 1.442695
    %v506 = vpow.pop %v505
    %v507 = vmul.f32 %v504, 1.442695
    %v508 = vpow.pop %v507
    %v509 = vadd.f32 %v506, 1.0
    %v510 = vadd.f32 %v508, 1.0
    %v511 = vrcp.pop %v509
    %v512 = vmul.f32 1.0, %v511
    %v513 = vrcp.pop %v510
    %v514 = vmul.f32 1.0, %v513
    %v515 = vadd.f32 %v209, %v454
    %v516 = vadd.f32 %v213, %v458
    %v517 = vxor.u32 %v515, 2147483648
    %v518 = vxor.u32 %v516, 2147483648
    %v519 = vmul.f32 %v517, 1.442695
    %v520 = vpow.pop %v519
    %v521 = vmul.f32 %v518, 1.442695
    %v522 = vpow.pop %v521
    %v523 = vadd.f32 %v520, 1.0
    %v524 = vadd.f32 %v522, 1.0
    %v525 = vrcp.pop %v523
    %v526 = vmul.f32 1.0, %v525
    %v527 = vrcp.pop %v524
    %v528 = vmul.f32 1.0, %v527
    %v529 = vld [vmem:[%s5] sm:$0x1]
    %v531 = vlaneseq
    %v532 = vshrl.u32 %v531, 7
    %v533 = vsub.s32 0, %v532
    %v534 = vrot.slane %v529, %v533
    %v536 = vadd.f32 %v495, %v534
    %v537 = vadd.f32 %v498, %v534
    %v538 = vmul.f32 %v512, %v536
    %v539 = vmul.f32 %v514, %v537
    %v540 = vadd.f32 %v250, %v538
    %v541 = vadd.f32 %v253, %v539
    %v542 = vtanh.pop %v540
    %v543 = vtanh.pop %v541
    %v544 = vsub.f32 %v66, %v542
    %v545 = vsub.f32 %v67, %v543
    %v546 = vmul.f32 %v526, %v544
    %v547 = vmul.f32 %v528, %v545
    %v548 = vadd.f32 %v542, %v546
    %v549 = vadd.f32 %v543, %v547
    %550 = vst [vmem:[#allocation8] sm:$0xff] %v548
    %551 = vst [vmem:[#allocation8 + $0x8] sm:$0xff] %v549
    // Predicated region
    $region38: #{tpu_custom_call.1} parent=1 // pred_check
      _
    $region39: #{tpu_custom_call.1} parent=1 // pred_check_branch
      %553 = sbr.rel (0) target = $region41
    $region40: #{tpu_custom_call.1} parent=1 // pred_region
      %s555 = ssub.s32 256, 256
      %556 = vsyncadd [#allocation4], %s555
      %s557 = sshll.u32 [#allocation8], 4
      %s558 = int_to_ptr.vmem [resolvable:$true] %s557
      %563 = dma.vmem_to_hbm [thread:$0]  %s558, 256, %s6, [#allocation4], 128, 128, 8
    $region41: #{tpu_custom_call.1} parent=1 // pred_fallthru
      _
    // Predicated region
    $region42: #{tpu_custom_call.1} parent=1 // pred_check
      _
    $region43: #{tpu_custom_call.1} parent=1 // pred_check_branch
      %565 = sbr.rel (0) target = $region45
    $region44: #{tpu_custom_call.1} parent=1 // pred_region
      %566 = dma.done [#allocation4], 256
    $region45: #{tpu_custom_call.1} parent=1 // pred_fallthru
      _
    %567 = vsyncpa [#allocation3], 1
    %568 = vsyncpa [#allocation6], 1
    %569 = vsyncpa [#allocation4], 1

</llo_original>
